<compile_context>
chip_gen: v6e
topology: v6e:2x2x1
jax: 0.10.0
libtpu: 0.0.40
codegen_flags: <defaults>
</compile_context>

<pallas_src>
import functools

import jax
import jax.numpy as jnp
import numpy as np
from jax.experimental import pallas as pl
from jax.experimental.pallas import tpu as pltpu


def _reorg_kernel(sel_ref, x_ref, o_ref, *, ch, t_h, sw, w_out):
    """One (batch, H-tile, phase) grid step.

    sel_ref: (sw, w_out)      constant 0/1 gather matrix for this phase
    x_ref:   (ch, t_h, sw)    t_h output-row groups, each = s input rows of W
    o_ref:   (ch, t_h, w_out) output block for this phase's channel block
    """
    x = x_ref[...].reshape(ch * t_h, sw)
    # Pure gather expressed as a matmul: every selection column has exactly
    # one 1, so each output lane is a copy of one input lane.  HIGHEST
    # precision keeps the f32 path exact.
    res = jnp.dot(x, sel_ref[...],
                  preferred_element_type=jnp.float32,
                  precision=jax.lax.Precision.HIGHEST)
    o_ref[...] = res.reshape(ch, t_h, w_out).astype(o_ref.dtype)


def _build_selection(stride, w, dtype):
    """0/1 gather matrices, one per (i, j) phase, for one output row group."""
    w_out = w // stride
    sel = np.zeros((stride * stride, stride * w, w_out), np.float32)
    xo = np.arange(w_out)
    for i in range(stride):
        for j in range(stride):
            sel[i * stride + j, i * w + xo * stride + j, xo] = 1.0
    return jnp.asarray(sel, dtype=dtype)


def _pick_t_h(h_out, ch, w, stride, itemsize, budget_bytes=6 * 2**20):
    """Largest H tile (in output rows) that is layout-legal and fits VMEM."""
    sw, w_out = stride * w, w // stride

    def padded(rows, cols):
        return (-(-rows // 8) * 8) * (-(-cols // 128) * 128)

    cands = {t for t in range(8, h_out + 1, 8) if h_out % t == 0}
    cands.add(h_out)  # full axis is always layout-legal
    for t in sorted(cands, reverse=True):
        # double-buffered input + output blocks (lane/sublane padded)
        blk = 2 * itemsize * ch * (padded(t, sw) + padded(t, w_out))
        if blk <= budget_bytes:
            return t
    # Extremely large C*W: fall back to the smallest legal tile.
    # (A channel grid axis would be the next refinement if even this spills.)
    return min(cands)


def reorg(x, stride):
    """Pallas implementation of the darknet Reorg layer (NCHW in/out)."""
    assert x.ndim == 4
    bs, ch, h, w = x.shape
    assert h % stride == 0
    assert w % stride == 0
    h_out, w_out = h // stride, w // stride
    n_phases = stride * stride
    sw = stride * w
    itemsize = jnp.dtype(x.dtype).itemsize

    t_h = _pick_t_h(h_out, ch, w, stride, itemsize)
    n_t = h_out // t_h

    sel = _build_selection(stride, w, x.dtype)

    # Metadata-only reshape: each output row group = s contiguous input rows.
    x_r = x.reshape(bs, ch, h_out, sw)

    out5 = pl.pallas_call(
        functools.partial(_reorg_kernel, ch=ch, t_h=t_h, sw=sw, w_out=w_out),
        out_shape=jax.ShapeDtypeStruct((bs, n_phases, ch, h_out, w_out), x.dtype),
        grid=(bs, n_t, n_phases),
        in_specs=[
            # Small per-phase gather matrix.
            pl.BlockSpec((None, sw, w_out), lambda b, t, q: (q, 0, 0)),
            # Input block index is phase-independent -> fetched once per
            # (batch, H-tile) and reused by all phases.
            pl.BlockSpec((None, ch, t_h, sw), lambda b, t, q: (b, 0, t, 0)),
        ],
        out_specs=pl.BlockSpec((None, None, ch, t_h, w_out),
                               lambda b, t, q: (b, q, 0, t, 0)),
        compiler_params=pltpu.CompilerParams(
            dimension_semantics=("parallel", "parallel", "arbitrary"),
            vmem_limit_bytes=32 * 1024 * 1024,
        ),
    )(sel, x_r)

    # Metadata-only reshape back to NCHW with phase-major output channels.
    return out5.reshape(bs, n_phases * ch, h_out, w_out)


def _reorg_reference(x, stride):
    """Pure-JAX reference matching the PyTorch view/transpose sequence."""
    bs, ch, h, w = x.shape
    h_out, w_out = h // stride, w // stride
    r = x.reshape(bs, ch, h_out, stride, w_out, stride)
    # out[b, i, j, c, yo, xo] = in[b, c, yo*s+i, xo*s+j]
    r = jnp.transpose(r, (0, 3, 5, 1, 2, 4))
    return r.reshape(bs, stride * stride * ch, h_out, w_out)


if __name__ == "__main__":
    key = jax.random.PRNGKey(0)
    stride = 2
    x = jax.random.normal(key, (2, 4, 16, 16), dtype=jnp.float32)

    out = jax.block_until_ready(reorg(x, stride))
    ref = _reorg_reference(x, stride)
    assert out.shape == (2, stride * stride * 4, 8, 8), out.shape
    assert out.dtype == x.dtype
    assert jnp.allclose(out, ref, rtol=1e-3, atol=1e-3), "f32 mismatch vs reference"

    # bf16 (packed dtype) path exercised explicitly.
    xb = x.astype(jnp.bfloat16)
    outb = jax.block_until_ready(reorg(xb, stride))
    refb = _reorg_reference(xb, stride)
    assert outb.dtype == jnp.bfloat16
    assert jnp.allclose(outb.astype(jnp.float32), refb.astype(jnp.float32),
                        rtol=2e-2, atol=2e-2), "bf16 mismatch vs reference"

    print("KERNEL_OK")
</pallas_src>

<mosaic_0001>
module attributes {stable_mosaic.version = 11 : i64} {
  func.func @_reorg_kernel(%arg0: i32, %arg1: i32, %arg2: i32, %arg3: memref<1x32x8xf32, #tpu.memory_space<vmem>>, %arg4: memref<1x4x8x32xf32, #tpu.memory_space<vmem>>, %arg5: memref<1x1x4x8x8xf32, #tpu.memory_space<vmem>>) attributes {dimension_semantics = [#tpu.dimension_semantics<parallel>, #tpu.dimension_semantics<parallel>, #tpu.dimension_semantics<arbitrary>], iteration_bounds = array<i64: 2, 1, 4>, scalar_prefetch = 0 : i64, scratch_operands = 0 : i64, tpu.core_type = #tpu.core_type<tc>, window_params = [{transform_indices = @transform_0, window_bounds = array<i64: 1, 32, 8>}, {transform_indices = @transform_1, window_bounds = array<i64: 1, 4, 8, 32>}, {transform_indices = @transform_2, window_bounds = array<i64: 1, 1, 4, 8, 8>}]} {
    %c0 = arith.constant 0 : index
    %c0_0 = arith.constant 0 : index
    %c0_1 = arith.constant 0 : index
    %c0_2 = arith.constant 0 : index
    %0 = vector.load %arg4[%c0, %c0_0, %c0_1, %c0_2] : memref<1x4x8x32xf32, #tpu.memory_space<vmem>>, vector<1x4x8x32xf32>
    %1 = vector.shape_cast %0 : vector<1x4x8x32xf32> to vector<4x8x32xf32>
    %2 = vector.shape_cast %1 : vector<4x8x32xf32> to vector<32x32xf32>
    %c0_3 = arith.constant 0 : index
    %c0_4 = arith.constant 0 : index
    %c0_5 = arith.constant 0 : index
    %3 = vector.load %arg3[%c0_3, %c0_4, %c0_5] : memref<1x32x8xf32, #tpu.memory_space<vmem>>, vector<1x32x8xf32>
    %4 = vector.shape_cast %3 : vector<1x32x8xf32> to vector<32x8xf32>
    %cst = arith.constant dense<0.000000e+00> : vector<32x8xf32>
    %5 = tpu.matmul %2, %4, %cst {dimension_numbers = #tpu.dot_dimension_numbers<[1], [0], [0], [1], [0, 0, 1, 1], [], []>, precision = #tpu.contract_precision<fp32>} : vector<32x32xf32>, vector<32x8xf32>, vector<32x8xf32> -> vector<32x8xf32>
    %6 = vector.shape_cast %5 : vector<32x8xf32> to vector<4x8x8xf32>
    %c0_6 = arith.constant 0 : index
    %c0_7 = arith.constant 0 : index
    %c0_8 = arith.constant 0 : index
    %c0_9 = arith.constant 0 : index
    %c0_10 = arith.constant 0 : index
    %7 = vector.load %arg5[%c0_6, %c0_7, %c0_8, %c0_9, %c0_10] : memref<1x1x4x8x8xf32, #tpu.memory_space<vmem>>, vector<1x1x4x8x8xf32>
    %8 = vector.shape_cast %7 : vector<1x1x4x8x8xf32> to vector<4x8x8xf32>
    %9 = vector.shape_cast %6 : vector<4x8x8xf32> to vector<1x1x4x8x8xf32>
    tpu.vector_store %arg5[%c0_6, %c0_7, %c0_8, %c0_9, %c0_10], %9 {strides = array<i32>} : memref<1x1x4x8x8xf32, #tpu.memory_space<vmem>>, vector<1x1x4x8x8xf32>,
    return
  }
  func.func @transform_0(%arg0: i32, %arg1: i32, %arg2: i32) -> (i32, i32, i32) {
    %c0_i32 = arith.constant 0 : i32
    %c0_i32_0 = arith.constant 0 : i32
    %c0_i32_1 = arith.constant 0 : i32
    return %arg2, %c0_i32, %c0_i32_0 : i32, i32, i32
  }
  func.func @transform_1(%arg0: i32, %arg1: i32, %arg2: i32) -> (i32, i32, i32, i32) {
    %c0_i32 = arith.constant 0 : i32
    %c0_i32_0 = arith.constant 0 : i32
    %c0_i32_1 = arith.constant 0 : i32
    return %arg0, %c0_i32, %arg1, %c0_i32_0 : i32, i32, i32, i32
  }
  func.func @transform_2(%arg0: i32, %arg1: i32, %arg2: i32) -> (i32, i32, i32, i32, i32) {
    %c0_i32 = arith.constant 0 : i32
    %c0_i32_0 = arith.constant 0 : i32
    %c0_i32_1 = arith.constant 0 : i32
    return %arg0, %arg2, %c0_i32, %arg1, %c0_i32_0 : i32, i32, i32, i32, i32
  }
}

</mosaic_0001>

<llo_original>
// kernel: tpu_custom_call.1
$region0: #{tpu_custom_call.1}
  #allocation0 [shape = 'u32[]', space=smem, size = 0x4, offset = 0x4, fixed_abs, tag = 'smem constant byte address 0x4 - core index']
  #allocation1 [shape = 'u32[144,128]{1,0:T(1,128)}', space=vmem, size = 0x12000, scoped, tag = 'internal scratch']
  %s0 = inlined_call_operand.vmem [shape: f32[4,32,8], index: 0, kind: input, shape index: {}]
  %s1 = inlined_call_operand.vmem [shape: f32[2,4,8,32], index: 1, kind: input, shape index: {}]
  %s2 = inlined_call_operand.hbm [shape: f32[2,4,4,8,8], index: 2, kind: output, shape index: {}]
  %s3 = sld [smem:[#allocation0]]
  $region41: #{tpu_custom_call.1} parent=0
    _
  %s5 = ssub.s32 1, %s3
  %s6 = scalar_select 0, %s5, %s3
  $region1: #{tpu_custom_call.1} parent=0
    #allocation2 [shape = 'u8[32768]{0}', space=vmem, size = 0x8000, scoped, tag = 'output window, operand 0']
    #allocation3 [shape = 's32[2]{0}', space=sflag, size = 0x8, scoped, tag = 'scoped memory for tpu_custom_call.1']
    %7 = vsyncpa [#allocation3], 0
    %s8 = scalar_lea.sflag [#allocation3], 1
    %9 = vsyncpa %s8, 0
    loop: start=0, step=1, limit=10
    $region2: #{tpu_custom_call.1} parent=1 // loop_pre_header
      _
    $region3: #{tpu_custom_call.1} parent=1 // loop_header
      %s11 = sphi 0, %s15
      %p12 = scmp.ge.s32.totalorder %s11, 10
      %s18 = sphi 0, %s37
      %s19 = sphi 0, %s33
      %s20 = sphi 0, %s29
      %s21 = sphi 0, %s18
      %s22 = sphi 0, %s19
      %s23 = sphi 0, %s20
      %s24 = sphi 0, %s21
      %s25 = sphi 0, %s22
      %s26 = sphi 0, %s23
      %s40 = sphi 0, %s42
      %s43 = sphi 0, %s40
      %s44 = sphi 0, %s43
      %s60 = sphi 0, %s44
      %s68 = sphi 0, %s70
      %s71 = sphi 0, %s68
      %s72 = sphi 0, %s71
      %s88 = sphi 0, %s72
      %s98 = sphi 0, %s100
      %s101 = sphi 0, %s98
      %s102 = sphi 0, %s101
      %s118 = sphi 0, %s102
    $region4: #{tpu_custom_call.1} parent=1 // loop_header_branch
      %14 = sbr.rel (%p12) target = $region8
    $region5: #{tpu_custom_call.1} parent=1 // loop_body
      %s16 = ssub.s32 %s11, 1
      %s17 = ssub.s32 %s11, 2
      %s27 = sadd.s32 1, %s20
      %p28 = scmp.ge.s32.totalorder %s27, 4
      %s29 = scalar_select %p28, 0, %s27
      %s30 = sadd.s32 1, %s19
      %s31 = scalar_select %p28, %s30, %s19
      %p32 = scmp.ge.s32.totalorder %s31, 1
      %s33 = scalar_select %p32, 0, %s31
      %s34 = sadd.s32 1, %s18
      %s35 = scalar_select %p32, %s34, %s18
      %p36 = scmp.ge.s32.totalorder %s35, 2
      %s37 = scalar_select %p36, 0, %s35
      %s38 = ssub.s32 %s20, %s29
      %p39 = scmp.eq.s32.totalorder %s38, 0
      %s41 = sadd.s32 %s40, 1
      %s42 = scalar_select %p39, %s40, %s41
      %p45 = pneg %p39
      %p46 = scmp.eq.s32.totalorder %s11, 7
      %p47 = por %p45, %p46
      %p48 = scmp.ne.s32.totalorder %s40, %s43
      %p49 = scmp.eq.s32.totalorder %s11, 0
      %p50 = por %p48, %p49
      %p51 = scmp.ne.s32.totalorder %s40, %s43
      %p52 = scmp.eq.s32.totalorder %s16, 7
      %p53 = por %p51, %p52
      %p54 = scmp.ne.s32.totalorder %s43, %s44
      %p55 = scmp.eq.s32.totalorder %s16, 0
      %p56 = por %p54, %p55
      %p57 = scmp.ne.s32.totalorder %s43, %s44
      %p58 = scmp.eq.s32.totalorder %s17, 7
      %p59 = por %p57, %p58
      %p61 = scmp.ne.s32.totalorder %s44, %s60
      %p62 = scmp.eq.s32.totalorder %s17, 0
      %p63 = por %p61, %p62
      %s64 = ssub.s32 %s18, %s37
      %s65 = ssub.s32 %s19, %s33
      %s66 = sor.u32 %s64, %s65
      %p67 = scmp.eq.s32.totalorder %s66, 0
      %s69 = sadd.s32 %s68, 1
      %s70 = scalar_select %p67, %s68, %s69
      %p73 = pneg %p67
      %p74 = scmp.eq.s32.totalorder %s11, 7
      %p75 = por %p73, %p74
      %p76 = scmp.ne.s32.totalorder %s68, %s71
      %p77 = scmp.eq.s32.totalorder %s11, 0
      %p78 = por %p76, %p77
      %p79 = scmp.ne.s32.totalorder %s68, %s71
      %p80 = scmp.eq.s32.totalorder %s16, 7
      %p81 = por %p79, %p80
      %p82 = scmp.ne.s32.totalorder %s71, %s72
      %p83 = scmp.eq.s32.totalorder %s16, 0
      %p84 = por %p82, %p83
      %p85 = scmp.ne.s32.totalorder %s71, %s72
      %p86 = scmp.eq.s32.totalorder %s17, 7
      %p87 = por %p85, %p86
      %p89 = scmp.ne.s32.totalorder %s72, %s88
      %p90 = scmp.eq.s32.totalorder %s17, 0
      %p91 = por %p89, %p90
      %s92 = ssub.s32 %s18, %s37
      %s93 = ssub.s32 %s20, %s29
      %s94 = sor.u32 %s92, %s93
      %s95 = ssub.s32 %s19, %s33
      %s96 = sor.u32 %s94, %s95
      %p97 = scmp.eq.s32.totalorder %s96, 0
      %s99 = sadd.s32 %s98, 1
      %s100 = scalar_select %p97, %s98, %s99
      %p103 = pneg %p97
      %p104 = scmp.eq.s32.totalorder %s11, 7
      %p105 = por %p103, %p104
      %p106 = scmp.ne.s32.totalorder %s98, %s101
      %p107 = scmp.eq.s32.totalorder %s11, 0
      %p108 = por %p106, %p107
      %p109 = scmp.ne.s32.totalorder %s98, %s101
      %p110 = scmp.eq.s32.totalorder %s16, 7
      %p111 = por %p109, %p110
      %p112 = scmp.ne.s32.totalorder %s101, %s102
      %p113 = scmp.eq.s32.totalorder %s16, 0
      %p114 = por %p112, %p113
      %p115 = scmp.ne.s32.totalorder %s101, %s102
      %p116 = scmp.eq.s32.totalorder %s17, 7
      %p117 = por %p115, %p116
      %p119 = scmp.ne.s32.totalorder %s102, %s118
      %p120 = scmp.eq.s32.totalorder %s17, 0
      %p121 = por %p119, %p120
      %p122 = scmp.le.s32.totalorder 1, %s11
      %p123 = scmp.lt.s32.totalorder %s11, 9
      %p124 = pnand %p122, %p123
      %p125 = pneg %p124
      // Predicated region
      $region9: #{tpu_custom_call.1} parent=5 // pred_check
        _
      $region10: #{tpu_custom_call.1} parent=5 // pred_check_branch
        %127 = sbr.rel (%p124) target = $region12
      $region11: #{tpu_custom_call.1} parent=5 // pred_region
        %s128 = ssub.s32 %s11, 1
      $region12: #{tpu_custom_call.1} parent=5 // pred_fallthru
        _
      %p129 = scmp.lt.s32.totalorder %s11, 8
      // Predicated region
      $region13: #{tpu_custom_call.1} parent=5 // pred_check
        %p130 = pneg %p129
      $region14: #{tpu_custom_call.1} parent=5 // pred_check_branch
        %132 = sbr.rel (%p130) target = $region16
      $region15: #{tpu_custom_call.1} parent=5 // pred_region
        // Predicated region
        $region17: #{tpu_custom_call.1} parent=15 // pred_check
          %p133 = pneg %p50
        $region18: #{tpu_custom_call.1} parent=15 // pred_check_branch
          %135 = sbr.rel (%p133) target = $region20
        $region19: #{tpu_custom_call.1} parent=15 // pred_region
          %p136 = scmp.lt.s32.totalorder %s20, 3
          %s137 = scalar_select %p136, %s20, 3
          %s138 = smul.addr %s137, 4
          %s139 = smul.addr %s138, 8
          %s140 = scalar_lea.vmem %s0, %s139
        $region20: #{tpu_custom_call.1} parent=15 // pred_fallthru
          _
        // Predicated region
        $region21: #{tpu_custom_call.1} parent=15 // pred_check
          %p141 = pneg %p78
        $region22: #{tpu_custom_call.1} parent=15 // pred_check_branch
          %143 = sbr.rel (%p141) target = $region24
        $region23: #{tpu_custom_call.1} parent=15 // pred_region
          %p144 = scmp.lt.s32.totalorder %s18, 1
          %s145 = scalar_select %p144, %s18, 1
          %p146 = scmp.lt.s32.totalorder %s19, 0
          %s147 = scalar_select %p146, %s19, 0
          %s148 = smul.addr %s145, 4
          %s149 = sadd.s32 %s147, %s148
          %s150 = smul.addr %s149, 8
          %s151 = scalar_lea.vmem %s1, %s150
        $region24: #{tpu_custom_call.1} parent=15 // pred_fallthru
          _
      $region16: #{tpu_custom_call.1} parent=5 // pred_fallthru
        _
      %p152 = scmp.le.s32.totalorder 1, %s11
      %p153 = scmp.lt.s32.totalorder %s11, 9
      %p154 = pnand %p152, %p153
      %p155 = pneg %p154
      // Predicated region
      $region25: #{tpu_custom_call.1} parent=5 // pred_check
        _
      $region26: #{tpu_custom_call.1} parent=5 // pred_check_branch
        %157 = sbr.rel (%p154) target = $region28
      $region27: #{tpu_custom_call.1} parent=5 // pred_region
        %s158 = ssub.s32 %s11, 1
        %p159 = scmp.lt.s32.totalorder %s23, 3
        %s160 = scalar_select %p159, %s23, 3
        %s161 = smul.addr %s160, 4
        %s162 = smul.addr %s161, 8
        %s163 = scalar_lea.vmem %s0, %s162
        %p164 = pneg %p56
        %p165 = pneg %p53
        %p166 = scmp.lt.s32.totalorder %s21, 1
        %s167 = scalar_select %p166, %s21, 1
        %p168 = scmp.lt.s32.totalorder %s22, 0
        %s169 = scalar_select %p168, %s22, 0
        %s170 = smul.addr %s167, 4
        %s171 = sadd.s32 %s169, %s170
        %s172 = smul.addr %s171, 8
        %s173 = scalar_lea.vmem %s1, %s172
        %p174 = pneg %p84
        %p175 = pneg %p81
        %p176 = pneg %p114
        %p177 = pneg %p111
        %s178 = sand.u32 %s101, 1
        %s179 = scalar_lea.sflag [#allocation3], %s178
        %s180 = sand.u32 %s101, 1
        %s181 = smul.addr %s180, 32
        %s182 = scalar_lea.vmem [#allocation2], %s181
        %p183 = scmp.lt.s32.totalorder %s23, 3
        %s184 = scalar_select %p183, %s23, 3
        %s185 = smul.addr %s184, 4
        %s186 = smul.addr %s185, 8
        %s187 = scalar_lea.vmem %s0, %s186
        %p188 = scmp.lt.s32.totalorder %s21, 1
        %s189 = scalar_select %p188, %s21, 1
        %p190 = scmp.lt.s32.totalorder %s22, 0
        %s191 = scalar_select %p190, %s22, 0
        %s192 = smul.addr %s189, 4
        %s193 = sadd.s32 %s191, %s192
        %s194 = smul.addr %s193, 8
        %s195 = scalar_lea.vmem %s1, %s194
        %v196 = vld [vmem:[%s195] sm:$0xff]
        %v197 = vld [vmem:[%s195 + $0x8] sm:$0xff]
        %v198 = vld [vmem:[%s195 + $0x10] sm:$0xff]
        %v199 = vld [vmem:[%s195 + $0x18] sm:$0xff]
        %v200 = vld [vmem:[%s187] sm:$0xff]
        %v201 = vld [vmem:[%s187 + $0x8] sm:$0xff]
        %v202 = vld [vmem:[%s187 + $0x10] sm:$0xff]
        %v203 = vld [vmem:[%s187 + $0x18] sm:$0xff]
        %vm204 = vcmask 261120
        %v206 = vsel %vm204, %v196, 0
        %v209 = vsel %vm204, %v197, 0
        %v212 = vsel %vm204, %v198, 0
        %v215 = vsel %vm204, %v199, 0
        %217 = vmatprep.subr.mxu0 0.0
        %218 = vmatpush1.msra.mxu0 0.0
        %219 = vmatprep.subr.mxu0 0.0
        %220 = vmatpush1.msra.mxu0 0.0
        %221 = vmatprep.subr.mxu0 0.0
        %222 = vmatpush1.msra.mxu0 0.0
        %223 = vmatprep.subr.mxu0 0.0
        %224 = vmatpush1.msra.mxu0 0.0
        %225 = vmatprep.subr.mxu0 0.0
        %226 = vmatpush1.msra.mxu0 0.0
        %227 = vmatprep.subr.mxu0 0.0
        %228 = vmatpush1.msra.mxu0 0.0
        %229 = vmatprep.subr.mxu0 0.0
        %230 = vmatpush1.msra.mxu0 0.0
        %231 = vmatprep.subr.mxu0 0.0
        %232 = vmatpush1.msra.mxu0 0.0
        %233 = vmatprep.subr.mxu0 0.0
        %234 = vmatpush1.msra.mxu0 0.0
        %235 = vmatprep.subr.mxu0 0.0
        %236 = vmatpush1.msra.mxu0 0.0
        %237 = vmatprep.subr.mxu0 0.0
        %238 = vmatpush1.msra.mxu0 0.0
        %239 = vmatprep.subr.mxu0 0.0
        %240 = vmatpush1.msra.mxu0 0.0
        %241 = vmatprep.subr.mxu0 0.0
        %v242 = vand.u32 %v203, 4294901760
        %243 = vmatpush1.msra.mxu0 %v242
        %244 = vmatprep.subr.mxu0 0.0
        %v245 = vand.u32 %v202, 4294901760
        %246 = vmatpush1.msra.mxu0 %v245
        %247 = vmatprep.subr.mxu0 0.0
        %v248 = vand.u32 %v201, 4294901760
        %249 = vmatpush1.msra.mxu0 %v248
        %250 = vmatprep.subr.mxu0 0.0
        %v251 = vand.u32 %v200, 4294901760
        %252 = vmatpush1.msra.mxu0 %v251
        %253 = vmatprep.subr.mxu0 0.0
        %254 = vmatpush2.msra.mxu0 0.0
        %255 = vmatprep.subr.mxu0 0.0
        %256 = vmatpush2.msra.mxu0 0.0
        %257 = vmatprep.subr.mxu0 0.0
        %258 = vmatpush2.msra.mxu0 0.0
        %259 = vmatprep.subr.mxu0 0.0
        %260 = vmatpush2.msra.mxu0 0.0
        %261 = vmatprep.subr.mxu0 0.0
        %262 = vmatpush2.msra.mxu0 0.0
        %263 = vmatprep.subr.mxu0 0.0
        %264 = vmatpush2.msra.mxu0 0.0
        %265 = vmatprep.subr.mxu0 0.0
        %266 = vmatpush2.msra.mxu0 0.0
        %267 = vmatprep.subr.mxu0 0.0
        %268 = vmatpush2.msra.mxu0 0.0
        %269 = vmatprep.subr.mxu0 0.0
        %270 = vmatpush2.msra.mxu0 0.0
        %271 = vmatprep.subr.mxu0 0.0
        %272 = vmatpush2.msra.mxu0 0.0
        %273 = vmatprep.subr.mxu0 0.0
        %274 = vmatpush2.msra.mxu0 0.0
        %275 = vmatprep.subr.mxu0 0.0
        %276 = vmatpush2.msra.mxu0 0.0
        %277 = vmatprep.subr.mxu0 0.0
        %278 = vmatpush2.msra.mxu0 0.0
        %279 = vmatprep.subr.mxu0 0.0
        %280 = vmatpush2.msra.mxu0 0.0
        %281 = vmatprep.subr.mxu0 0.0
        %282 = vmatpush2.msra.mxu0 0.0
        %283 = vmatprep.subr.mxu0 0.0
        %284 = vmatpush2.msra.mxu0 0.0
        %285 = vmatprep.mubr.f32.mxu0 0.0
        %v286 = vand.u32 %v206, 4294901760
        %v287 = vsub.f32 %v206, %v286
        %v288 = vand.u32 %v287, 4294901760
        %v289 = vsub.f32 %v287, %v288
        %v290 = vand.u32 %v289, 4294901760
        %291 = vmatmul.mubr.f32.gmra.mxu0 %v290
        %v292 = vpop.f32.mrf.mxu0
        %v293 = vadd.f32 0.0, %v292
        %v294 = vpop.f32.mrf.mxu0
        %295 = vmatprep.mubr.f32.mxu0 0.0
        %v296 = vand.u32 %v209, 4294901760
        %v297 = vsub.f32 %v209, %v296
        %v298 = vand.u32 %v297, 4294901760
        %v299 = vsub.f32 %v297, %v298
        %v300 = vand.u32 %v299, 4294901760
        %301 = vmatmul.mubr.f32.gmra.mxu0 %v300
        %v302 = vpop.f32.mrf.mxu0
        %v303 = vadd.f32 0.0, %v302
        %v304 = vpop.f32.mrf.mxu0
        %305 = vmatprep.mubr.f32.mxu0 0.0
        %v306 = vand.u32 %v212, 4294901760
        %v307 = vsub.f32 %v212, %v306
        %v308 = vand.u32 %v307, 4294901760
        %v309 = vsub.f32 %v307, %v308
        %v310 = vand.u32 %v309, 4294901760
        %311 = vmatmul.mubr.f32.gmra.mxu0 %v310
        %v312 = vpop.f32.mrf.mxu0
        %v313 = vadd.f32 0.0, %v312
        %v314 = vpop.f32.mrf.mxu0
        %315 = vmatprep.mubr.f32.mxu0 0.0
        %v316 = vand.u32 %v215, 4294901760
        %v317 = vsub.f32 %v215, %v316
        %v318 = vand.u32 %v317, 4294901760
        %v319 = vsub.f32 %v317, %v318
        %v320 = vand.u32 %v319, 4294901760
        %321 = vmatmul.mubr.f32.gmra.mxu0 %v320
        %v322 = vpop.f32.mrf.mxu0
        %v323 = vadd.f32 0.0, %v322
        %v324 = vpop.f32.mrf.mxu0
        %325 = vdwg.mxu0
        %326 = vmatprep.subr.mxu0 0.0
        %327 = vmatpush1.msra.mxu0 0.0
        %328 = vmatprep.subr.mxu0 0.0
        %329 = vmatpush1.msra.mxu0 0.0
        %330 = vmatprep.subr.mxu0 0.0
        %331 = vmatpush1.msra.mxu0 0.0
        %332 = vmatprep.subr.mxu0 0.0
        %333 = vmatpush1.msra.mxu0 0.0
        %334 = vmatprep.subr.mxu0 0.0
        %335 = vmatpush1.msra.mxu0 0.0
        %336 = vmatprep.subr.mxu0 0.0
        %337 = vmatpush1.msra.mxu0 0.0
        %338 = vmatprep.subr.mxu0 0.0
        %339 = vmatpush1.msra.mxu0 0.0
        %340 = vmatprep.subr.mxu0 0.0
        %341 = vmatpush1.msra.mxu0 0.0
        %342 = vmatprep.subr.mxu0 0.0
        %343 = vmatpush1.msra.mxu0 0.0
        %344 = vmatprep.subr.mxu0 0.0
        %345 = vmatpush1.msra.mxu0 0.0
        %346 = vmatprep.subr.mxu0 0.0
        %347 = vmatpush1.msra.mxu0 0.0
        %348 = vmatprep.subr.mxu0 0.0
        %349 = vmatpush1.msra.mxu0 0.0
        %350 = vmatprep.subr.mxu0 0.0
        %v351 = vand.u32 %v203, 4294901760
        %v352 = vsub.f32 %v203, %v351
        %v353 = vand.u32 %v352, 4294901760
        %v354 = vsub.f32 %v352, %v353
        %v355 = vand.u32 %v354, 4294901760
        %356 = vmatpush1.msra.mxu0 %v355
        %357 = vmatprep.subr.mxu0 0.0
        %v358 = vand.u32 %v202, 4294901760
        %v359 = vsub.f32 %v202, %v358
        %v360 = vand.u32 %v359, 4294901760
        %v361 = vsub.f32 %v359, %v360
        %v362 = vand.u32 %v361, 4294901760
        %363 = vmatpush1.msra.mxu0 %v362
        %364 = vmatprep.subr.mxu0 0.0
        %v365 = vand.u32 %v201, 4294901760
        %v366 = vsub.f32 %v201, %v365
        %v367 = vand.u32 %v366, 4294901760
        %v368 = vsub.f32 %v366, %v367
        %v369 = vand.u32 %v368, 4294901760
        %370 = vmatpush1.msra.mxu0 %v369
        %371 = vmatprep.subr.mxu0 0.0
        %v372 = vand.u32 %v200, 4294901760
        %v373 = vsub.f32 %v200, %v372
        %v374 = vand.u32 %v373, 4294901760
        %v375 = vsub.f32 %v373, %v374
        %v376 = vand.u32 %v375, 4294901760
        %377 = vmatpush1.msra.mxu0 %v376
        %378 = vmatprep.subr.mxu0 0.0
        %379 = vmatpush2.msra.mxu0 0.0
        %380 = vmatprep.subr.mxu0 0.0
        %381 = vmatpush2.msra.mxu0 0.0
        %382 = vmatprep.subr.mxu0 0.0
        %383 = vmatpush2.msra.mxu0 0.0
        %384 = vmatprep.subr.mxu0 0.0
        %385 = vmatpush2.msra.mxu0 0.0
        %386 = vmatprep.subr.mxu0 0.0
        %387 = vmatpush2.msra.mxu0 0.0
        %388 = vmatprep.subr.mxu0 0.0
        %389 = vmatpush2.msra.mxu0 0.0
        %390 = vmatprep.subr.mxu0 0.0
        %391 = vmatpush2.msra.mxu0 0.0
        %392 = vmatprep.subr.mxu0 0.0
        %393 = vmatpush2.msra.mxu0 0.0
        %394 = vmatprep.subr.mxu0 0.0
        %395 = vmatpush2.msra.mxu0 0.0
        %396 = vmatprep.subr.mxu0 0.0
        %397 = vmatpush2.msra.mxu0 0.0
        %398 = vmatprep.subr.mxu0 0.0
        %399 = vmatpush2.msra.mxu0 0.0
        %400 = vmatprep.subr.mxu0 0.0
        %401 = vmatpush2.msra.mxu0 0.0
        %402 = vmatprep.subr.mxu0 0.0
        %403 = vmatpush2.msra.mxu0 0.0
        %404 = vmatprep.subr.mxu0 0.0
        %405 = vmatpush2.msra.mxu0 0.0
        %406 = vmatprep.subr.mxu0 0.0
        %407 = vmatpush2.msra.mxu0 0.0
        %408 = vmatprep.subr.mxu0 0.0
        %409 = vmatpush2.msra.mxu0 0.0
        %410 = vmatprep.mubr.f32.mxu0 0.0
        %v411 = vand.u32 %v206, 4294901760
        %412 = vmatmul.mubr.f32.gmra.mxu0 %v411
        %v413 = vpop.f32.mrf.mxu0
        %v414 = vadd.f32 %v293, %v413
        %v415 = vpop.f32.mrf.mxu0
        %416 = vmatprep.mubr.f32.mxu0 0.0
        %v417 = vand.u32 %v209, 4294901760
        %418 = vmatmul.mubr.f32.gmra.mxu0 %v417
        %v419 = vpop.f32.mrf.mxu0
        %v420 = vadd.f32 %v303, %v419
        %v421 = vpop.f32.mrf.mxu0
        %422 = vmatprep.mubr.f32.mxu0 0.0
        %v423 = vand.u32 %v212, 4294901760
        %424 = vmatmul.mubr.f32.gmra.mxu0 %v423
        %v425 = vpop.f32.mrf.mxu0
        %v426 = vadd.f32 %v313, %v425
        %v427 = vpop.f32.mrf.mxu0
        %428 = vmatprep.mubr.f32.mxu0 0.0
        %v429 = vand.u32 %v215, 4294901760
        %430 = vmatmul.mubr.f32.gmra.mxu0 %v429
        %v431 = vpop.f32.mrf.mxu0
        %v432 = vadd.f32 %v323, %v431
        %v433 = vpop.f32.mrf.mxu0
        %434 = vdwg.mxu0
        %435 = vmatprep.subr.mxu0 0.0
        %436 = vmatpush1.msra.mxu0 0.0
        %437 = vmatprep.subr.mxu0 0.0
        %438 = vmatpush1.msra.mxu0 0.0
        %439 = vmatprep.subr.mxu0 0.0
        %440 = vmatpush1.msra.mxu0 0.0
        %441 = vmatprep.subr.mxu0 0.0
        %442 = vmatpush1.msra.mxu0 0.0
        %443 = vmatprep.subr.mxu0 0.0
        %444 = vmatpush1.msra.mxu0 0.0
        %445 = vmatprep.subr.mxu0 0.0
        %446 = vmatpush1.msra.mxu0 0.0
        %447 = vmatprep.subr.mxu0 0.0
        %448 = vmatpush1.msra.mxu0 0.0
        %449 = vmatprep.subr.mxu0 0.0
        %450 = vmatpush1.msra.mxu0 0.0
        %451 = vmatprep.subr.mxu0 0.0
        %452 = vmatpush1.msra.mxu0 0.0
        %453 = vmatprep.subr.mxu0 0.0
        %454 = vmatpush1.msra.mxu0 0.0
        %455 = vmatprep.subr.mxu0 0.0
        %456 = vmatpush1.msra.mxu0 0.0
        %457 = vmatprep.subr.mxu0 0.0
        %458 = vmatpush1.msra.mxu0 0.0
        %459 = vmatprep.subr.mxu0 0.0
        %v460 = vand.u32 %v203, 4294901760
        %v461 = vsub.f32 %v203, %v460
        %462 = vmatpush1.msra.mxu0 %v461
        %463 = vmatprep.subr.mxu0 0.0
        %v464 = vand.u32 %v202, 4294901760
        %v465 = vsub.f32 %v202, %v464
        %466 = vmatpush1.msra.mxu0 %v465
        %467 = vmatprep.subr.mxu0 0.0
        %v468 = vand.u32 %v201, 4294901760
        %v469 = vsub.f32 %v201, %v468
        %470 = vmatpush1.msra.mxu0 %v469
        %471 = vmatprep.subr.mxu0 0.0
        %v472 = vand.u32 %v200, 4294901760
        %v473 = vsub.f32 %v200, %v472
        %474 = vmatpush1.msra.mxu0 %v473
        %475 = vmatprep.subr.mxu0 0.0
        %476 = vmatpush2.msra.mxu0 0.0
        %477 = vmatprep.subr.mxu0 0.0
        %478 = vmatpush2.msra.mxu0 0.0
        %479 = vmatprep.subr.mxu0 0.0
        %480 = vmatpush2.msra.mxu0 0.0
        %481 = vmatprep.subr.mxu0 0.0
        %482 = vmatpush2.msra.mxu0 0.0
        %483 = vmatprep.subr.mxu0 0.0
        %484 = vmatpush2.msra.mxu0 0.0
        %485 = vmatprep.subr.mxu0 0.0
        %486 = vmatpush2.msra.mxu0 0.0
        %487 = vmatprep.subr.mxu0 0.0
        %488 = vmatpush2.msra.mxu0 0.0
        %489 = vmatprep.subr.mxu0 0.0
        %490 = vmatpush2.msra.mxu0 0.0
        %491 = vmatprep.subr.mxu0 0.0
        %492 = vmatpush2.msra.mxu0 0.0
        %493 = vmatprep.subr.mxu0 0.0
        %494 = vmatpush2.msra.mxu0 0.0
        %495 = vmatprep.subr.mxu0 0.0
        %496 = vmatpush2.msra.mxu0 0.0
        %497 = vmatprep.subr.mxu0 0.0
        %498 = vmatpush2.msra.mxu0 0.0
        %499 = vmatprep.subr.mxu0 0.0
        %500 = vmatpush2.msra.mxu0 0.0
        %501 = vmatprep.subr.mxu0 0.0
        %502 = vmatpush2.msra.mxu0 0.0
        %503 = vmatprep.subr.mxu0 0.0
        %504 = vmatpush2.msra.mxu0 0.0
        %505 = vmatprep.subr.mxu0 0.0
        %506 = vmatpush2.msra.mxu0 0.0
        %507 = vmatprep.mubr.f32.mxu0 0.0
        %v508 = vand.u32 %v206, 4294901760
        %v509 = vsub.f32 %v206, %v508
        %510 = vmatmul.mubr.f32.gmra.mxu0 %v509
        %v511 = vpop.f32.mrf.mxu0
        %v512 = vadd.f32 %v414, %v511
        %v513 = vpop.f32.mrf.mxu0
        %514 = vmatprep.mubr.f32.mxu0 0.0
        %v515 = vand.u32 %v209, 4294901760
        %v516 = vsub.f32 %v209, %v515
        %517 = vmatmul.mubr.f32.gmra.mxu0 %v516
        %v518 = vpop.f32.mrf.mxu0
        %v519 = vadd.f32 %v420, %v518
        %v520 = vpop.f32.mrf.mxu0
        %521 = vmatprep.mubr.f32.mxu0 0.0
        %v522 = vand.u32 %v212, 4294901760
        %v523 = vsub.f32 %v212, %v522
        %524 = vmatmul.mubr.f32.gmra.mxu0 %v523
        %v525 = vpop.f32.mrf.mxu0
        %v526 = vadd.f32 %v426, %v525
        %v527 = vpop.f32.mrf.mxu0
        %528 = vmatprep.mubr.f32.mxu0 0.0
        %v529 = vand.u32 %v215, 4294901760
        %v530 = vsub.f32 %v215, %v529
        %531 = vmatmul.mubr.f32.gmra.mxu0 %v530
        %v532 = vpop.f32.mrf.mxu0
        %v533 = vadd.f32 %v432, %v532
        %v534 = vpop.f32.mrf.mxu0
        %535 = vdwg.mxu0
        %536 = vmatprep.subr.mxu0 0.0
        %537 = vmatpush1.msra.mxu0 0.0
        %538 = vmatprep.subr.mxu0 0.0
        %539 = vmatpush1.msra.mxu0 0.0
        %540 = vmatprep.subr.mxu0 0.0
        %541 = vmatpush1.msra.mxu0 0.0
        %542 = vmatprep.subr.mxu0 0.0
        %543 = vmatpush1.msra.mxu0 0.0
        %544 = vmatprep.subr.mxu0 0.0
        %545 = vmatpush1.msra.mxu0 0.0
        %546 = vmatprep.subr.mxu0 0.0
        %547 = vmatpush1.msra.mxu0 0.0
        %548 = vmatprep.subr.mxu0 0.0
        %549 = vmatpush1.msra.mxu0 0.0
        %550 = vmatprep.subr.mxu0 0.0
        %551 = vmatpush1.msra.mxu0 0.0
        %552 = vmatprep.subr.mxu0 0.0
        %553 = vmatpush1.msra.mxu0 0.0
        %554 = vmatprep.subr.mxu0 0.0
        %555 = vmatpush1.msra.mxu0 0.0
        %556 = vmatprep.subr.mxu0 0.0
        %557 = vmatpush1.msra.mxu0 0.0
        %558 = vmatprep.subr.mxu0 0.0
        %559 = vmatpush1.msra.mxu0 0.0
        %560 = vmatprep.subr.mxu0 0.0
        %v561 = vand.u32 %v203, 4294901760
        %562 = vmatpush1.msra.mxu0 %v561
        %563 = vmatprep.subr.mxu0 0.0
        %v564 = vand.u32 %v202, 4294901760
        %565 = vmatpush1.msra.mxu0 %v564
        %566 = vmatprep.subr.mxu0 0.0
        %v567 = vand.u32 %v201, 4294901760
        %568 = vmatpush1.msra.mxu0 %v567
        %569 = vmatprep.subr.mxu0 0.0
        %v570 = vand.u32 %v200, 4294901760
        %571 = vmatpush1.msra.mxu0 %v570
        %572 = vmatprep.subr.mxu0 0.0
        %573 = vmatpush2.msra.mxu0 0.0
        %574 = vmatprep.subr.mxu0 0.0
        %575 = vmatpush2.msra.mxu0 0.0
        %576 = vmatprep.subr.mxu0 0.0
        %577 = vmatpush2.msra.mxu0 0.0
        %578 = vmatprep.subr.mxu0 0.0
        %579 = vmatpush2.msra.mxu0 0.0
        %580 = vmatprep.subr.mxu0 0.0
        %581 = vmatpush2.msra.mxu0 0.0
        %582 = vmatprep.subr.mxu0 0.0
        %583 = vmatpush2.msra.mxu0 0.0
        %584 = vmatprep.subr.mxu0 0.0
        %585 = vmatpush2.msra.mxu0 0.0
        %586 = vmatprep.subr.mxu0 0.0
        %587 = vmatpush2.msra.mxu0 0.0
        %588 = vmatprep.subr.mxu0 0.0
        %589 = vmatpush2.msra.mxu0 0.0
        %590 = vmatprep.subr.mxu0 0.0
        %591 = vmatpush2.msra.mxu0 0.0
        %592 = vmatprep.subr.mxu0 0.0
        %593 = vmatpush2.msra.mxu0 0.0
        %594 = vmatprep.subr.mxu0 0.0
        %595 = vmatpush2.msra.mxu0 0.0
        %596 = vmatprep.subr.mxu0 0.0
        %597 = vmatpush2.msra.mxu0 0.0
        %598 = vmatprep.subr.mxu0 0.0
        %599 = vmatpush2.msra.mxu0 0.0
        %600 = vmatprep.subr.mxu0 0.0
        %601 = vmatpush2.msra.mxu0 0.0
        %602 = vmatprep.subr.mxu0 0.0
        %603 = vmatpush2.msra.mxu0 0.0
        %604 = vmatprep.mubr.f32.mxu0 0.0
        %v605 = vand.u32 %v206, 4294901760
        %v606 = vsub.f32 %v206, %v605
        %v607 = vand.u32 %v606, 4294901760
        %608 = vmatmul.mubr.f32.gmra.mxu0 %v607
        %v609 = vpop.f32.mrf.mxu0
        %v610 = vadd.f32 %v512, %v609
        %v611 = vpop.f32.mrf.mxu0
        %612 = vmatprep.mubr.f32.mxu0 0.0
        %v613 = vand.u32 %v209, 4294901760
        %v614 = vsub.f32 %v209, %v613
        %v615 = vand.u32 %v614, 4294901760
        %616 = vmatmul.mubr.f32.gmra.mxu0 %v615
        %v617 = vpop.f32.mrf.mxu0
        %v618 = vadd.f32 %v519, %v617
        %v619 = vpop.f32.mrf.mxu0
        %620 = vmatprep.mubr.f32.mxu0 0.0
        %v621 = vand.u32 %v212, 4294901760
        %v622 = vsub.f32 %v212, %v621
        %v623 = vand.u32 %v622, 4294901760
        %624 = vmatmul.mubr.f32.gmra.mxu0 %v623
        %v625 = vpop.f32.mrf.mxu0
        %v626 = vadd.f32 %v526, %v625
        %v627 = vpop.f32.mrf.mxu0
        %628 = vmatprep.mubr.f32.mxu0 0.0
        %v629 = vand.u32 %v215, 4294901760
        %v630 = vsub.f32 %v215, %v629
        %v631 = vand.u32 %v630, 4294901760
        %632 = vmatmul.mubr.f32.gmra.mxu0 %v631
        %v633 = vpop.f32.mrf.mxu0
        %v634 = vadd.f32 %v533, %v633
        %v635 = vpop.f32.mrf.mxu0
        %636 = vdwg.mxu0
        %637 = vmatprep.subr.mxu0 0.0
        %638 = vmatpush1.msra.mxu0 0.0
        %639 = vmatprep.subr.mxu0 0.0
        %640 = vmatpush1.msra.mxu0 0.0
        %641 = vmatprep.subr.mxu0 0.0
        %642 = vmatpush1.msra.mxu0 0.0
        %643 = vmatprep.subr.mxu0 0.0
        %644 = vmatpush1.msra.mxu0 0.0
        %645 = vmatprep.subr.mxu0 0.0
        %646 = vmatpush1.msra.mxu0 0.0
        %647 = vmatprep.subr.mxu0 0.0
        %648 = vmatpush1.msra.mxu0 0.0
        %649 = vmatprep.subr.mxu0 0.0
        %650 = vmatpush1.msra.mxu0 0.0
        %651 = vmatprep.subr.mxu0 0.0
        %652 = vmatpush1.msra.mxu0 0.0
        %653 = vmatprep.subr.mxu0 0.0
        %654 = vmatpush1.msra.mxu0 0.0
        %655 = vmatprep.subr.mxu0 0.0
        %656 = vmatpush1.msra.mxu0 0.0
        %657 = vmatprep.subr.mxu0 0.0
        %658 = vmatpush1.msra.mxu0 0.0
        %659 = vmatprep.subr.mxu0 0.0
        %660 = vmatpush1.msra.mxu0 0.0
        %661 = vmatprep.subr.mxu0 0.0
        %v662 = vand.u32 %v203, 4294901760
        %v663 = vsub.f32 %v203, %v662
        %v664 = vand.u32 %v663, 4294901760
        %665 = vmatpush1.msra.mxu0 %v664
        %666 = vmatprep.subr.mxu0 0.0
        %v667 = vand.u32 %v202, 4294901760
        %v668 = vsub.f32 %v202, %v667
        %v669 = vand.u32 %v668, 4294901760
        %670 = vmatpush1.msra.mxu0 %v669
        %671 = vmatprep.subr.mxu0 0.0
        %v672 = vand.u32 %v201, 4294901760
        %v673 = vsub.f32 %v201, %v672
        %v674 = vand.u32 %v673, 4294901760
        %675 = vmatpush1.msra.mxu0 %v674
        %676 = vmatprep.subr.mxu0 0.0
        %v677 = vand.u32 %v200, 4294901760
        %v678 = vsub.f32 %v200, %v677
        %v679 = vand.u32 %v678, 4294901760
        %680 = vmatpush1.msra.mxu0 %v679
        %681 = vmatprep.subr.mxu0 0.0
        %682 = vmatpush2.msra.mxu0 0.0
        %683 = vmatprep.subr.mxu0 0.0
        %684 = vmatpush2.msra.mxu0 0.0
        %685 = vmatprep.subr.mxu0 0.0
        %686 = vmatpush2.msra.mxu0 0.0
        %687 = vmatprep.subr.mxu0 0.0
        %688 = vmatpush2.msra.mxu0 0.0
        %689 = vmatprep.subr.mxu0 0.0
        %690 = vmatpush2.msra.mxu0 0.0
        %691 = vmatprep.subr.mxu0 0.0
        %692 = vmatpush2.msra.mxu0 0.0
        %693 = vmatprep.subr.mxu0 0.0
        %694 = vmatpush2.msra.mxu0 0.0
        %695 = vmatprep.subr.mxu0 0.0
        %696 = vmatpush2.msra.mxu0 0.0
        %697 = vmatprep.subr.mxu0 0.0
        %698 = vmatpush2.msra.mxu0 0.0
        %699 = vmatprep.subr.mxu0 0.0
        %700 = vmatpush2.msra.mxu0 0.0
        %701 = vmatprep.subr.mxu0 0.0
        %702 = vmatpush2.msra.mxu0 0.0
        %703 = vmatprep.subr.mxu0 0.0
        %704 = vmatpush2.msra.mxu0 0.0
        %705 = vmatprep.subr.mxu0 0.0
        %706 = vmatpush2.msra.mxu0 0.0
        %707 = vmatprep.subr.mxu0 0.0
        %708 = vmatpush2.msra.mxu0 0.0
        %709 = vmatprep.subr.mxu0 0.0
        %710 = vmatpush2.msra.mxu0 0.0
        %711 = vmatprep.subr.mxu0 0.0
        %712 = vmatpush2.msra.mxu0 0.0
        %713 = vmatprep.mubr.f32.mxu0 0.0
        %v714 = vand.u32 %v206, 4294901760
        %715 = vmatmul.mubr.f32.gmra.mxu0 %v714
        %v716 = vpop.f32.mrf.mxu0
        %v717 = vadd.f32 %v610, %v716
        %v718 = vpop.f32.mrf.mxu0
        %719 = vmatprep.mubr.f32.mxu0 0.0
        %v720 = vand.u32 %v209, 4294901760
        %721 = vmatmul.mubr.f32.gmra.mxu0 %v720
        %v722 = vpop.f32.mrf.mxu0
        %v723 = vadd.f32 %v618, %v722
        %v724 = vpop.f32.mrf.mxu0
        %725 = vmatprep.mubr.f32.mxu0 0.0
        %v726 = vand.u32 %v212, 4294901760
        %727 = vmatmul.mubr.f32.gmra.mxu0 %v726
        %v728 = vpop.f32.mrf.mxu0
        %v729 = vadd.f32 %v626, %v728
        %v730 = vpop.f32.mrf.mxu0
        %731 = vmatprep.mubr.f32.mxu0 0.0
        %v732 = vand.u32 %v215, 4294901760
        %733 = vmatmul.mubr.f32.gmra.mxu0 %v732
        %v734 = vpop.f32.mrf.mxu0
        %v735 = vadd.f32 %v634, %v734
        %v736 = vpop.f32.mrf.mxu0
        %737 = vdwg.mxu0
        %738 = vmatprep.subr.mxu0 0.0
        %739 = vmatpush1.msra.mxu0 0.0
        %740 = vmatprep.subr.mxu0 0.0
        %741 = vmatpush1.msra.mxu0 0.0
        %742 = vmatprep.subr.mxu0 0.0
        %743 = vmatpush1.msra.mxu0 0.0
        %744 = vmatprep.subr.mxu0 0.0
        %745 = vmatpush1.msra.mxu0 0.0
        %746 = vmatprep.subr.mxu0 0.0
        %747 = vmatpush1.msra.mxu0 0.0
        %748 = vmatprep.subr.mxu0 0.0
        %749 = vmatpush1.msra.mxu0 0.0
        %750 = vmatprep.subr.mxu0 0.0
        %751 = vmatpush1.msra.mxu0 0.0
        %752 = vmatprep.subr.mxu0 0.0
        %753 = vmatpush1.msra.mxu0 0.0
        %754 = vmatprep.subr.mxu0 0.0
        %755 = vmatpush1.msra.mxu0 0.0
        %756 = vmatprep.subr.mxu0 0.0
        %757 = vmatpush1.msra.mxu0 0.0
        %758 = vmatprep.subr.mxu0 0.0
        %759 = vmatpush1.msra.mxu0 0.0
        %760 = vmatprep.subr.mxu0 0.0
        %761 = vmatpush1.msra.mxu0 0.0
        %762 = vmatprep.subr.mxu0 0.0
        %v763 = vand.u32 %v203, 4294901760
        %764 = vmatpush1.msra.mxu0 %v763
        %765 = vmatprep.subr.mxu0 0.0
        %v766 = vand.u32 %v202, 4294901760
        %767 = vmatpush1.msra.mxu0 %v766
        %768 = vmatprep.subr.mxu0 0.0
        %v769 = vand.u32 %v201, 4294901760
        %770 = vmatpush1.msra.mxu0 %v769
        %771 = vmatprep.subr.mxu0 0.0
        %v772 = vand.u32 %v200, 4294901760
        %773 = vmatpush1.msra.mxu0 %v772
        %774 = vmatprep.subr.mxu0 0.0
        %775 = vmatpush2.msra.mxu0 0.0
        %776 = vmatprep.subr.mxu0 0.0
        %777 = vmatpush2.msra.mxu0 0.0
        %778 = vmatprep.subr.mxu0 0.0
        %779 = vmatpush2.msra.mxu0 0.0
        %780 = vmatprep.subr.mxu0 0.0
        %781 = vmatpush2.msra.mxu0 0.0
        %782 = vmatprep.subr.mxu0 0.0
        %783 = vmatpush2.msra.mxu0 0.0
        %784 = vmatprep.subr.mxu0 0.0
        %785 = vmatpush2.msra.mxu0 0.0
        %786 = vmatprep.subr.mxu0 0.0
        %787 = vmatpush2.msra.mxu0 0.0
        %788 = vmatprep.subr.mxu0 0.0
        %789 = vmatpush2.msra.mxu0 0.0
        %790 = vmatprep.subr.mxu0 0.0
        %791 = vmatpush2.msra.mxu0 0.0
        %792 = vmatprep.subr.mxu0 0.0
        %793 = vmatpush2.msra.mxu0 0.0
        %794 = vmatprep.subr.mxu0 0.0
        %795 = vmatpush2.msra.mxu0 0.0
        %796 = vmatprep.subr.mxu0 0.0
        %797 = vmatpush2.msra.mxu0 0.0
        %798 = vmatprep.subr.mxu0 0.0
        %799 = vmatpush2.msra.mxu0 0.0
        %800 = vmatprep.subr.mxu0 0.0
        %801 = vmatpush2.msra.mxu0 0.0
        %802 = vmatprep.subr.mxu0 0.0
        %803 = vmatpush2.msra.mxu0 0.0
        %804 = vmatprep.subr.mxu0 0.0
        %805 = vmatpush2.msra.mxu0 0.0
        %806 = vmatprep.mubr.f32.mxu0 0.0
        %v807 = vand.u32 %v206, 4294901760
        %808 = vmatmul.mubr.f32.gmra.mxu0 %v807
        %v809 = vpop.f32.mrf.mxu0
        %v810 = vadd.f32 %v717, %v809
        %v811 = vpop.f32.mrf.mxu0
        %812 = vmatprep.mubr.f32.mxu0 0.0
        %v813 = vand.u32 %v209, 4294901760
        %814 = vmatmul.mubr.f32.gmra.mxu0 %v813
        %v815 = vpop.f32.mrf.mxu0
        %v816 = vadd.f32 %v723, %v815
        %v817 = vpop.f32.mrf.mxu0
        %818 = vmatprep.mubr.f32.mxu0 0.0
        %v819 = vand.u32 %v212, 4294901760
        %820 = vmatmul.mubr.f32.gmra.mxu0 %v819
        %v821 = vpop.f32.mrf.mxu0
        %v822 = vadd.f32 %v729, %v821
        %v823 = vpop.f32.mrf.mxu0
        %824 = vmatprep.mubr.f32.mxu0 0.0
        %v825 = vand.u32 %v215, 4294901760
        %826 = vmatmul.mubr.f32.gmra.mxu0 %v825
        %v827 = vpop.f32.mrf.mxu0
        %v828 = vadd.f32 %v735, %v827
        %v829 = vpop.f32.mrf.mxu0
        %830 = vdwg.mxu0
        %vm831 = vcmask 64512
        %832 = vst.msk [vmem:[%s182] sm:$0xff] %vm831, %v810
        %833 = vst.msk [vmem:[%s182 + $0x8] sm:$0xff] %vm831, %v816
        %834 = vst.msk [vmem:[%s182 + $0x10] sm:$0xff] %vm831, %v822
        %835 = vst.msk [vmem:[%s182 + $0x18] sm:$0xff] %vm831, %v828
        %s836 = sand.u32 %s101, 1
        %s837 = scalar_lea.sflag [#allocation3], %s836
        %s838 = sand.u32 %s101, 1
        %s839 = smul.addr %s838, 32
        %s840 = scalar_lea.vmem [#allocation2], %s839
        // Predicated region
        $region29: #{tpu_custom_call.1} parent=27 // pred_check
          %p841 = pneg %p111
        $region30: #{tpu_custom_call.1} parent=27 // pred_check_branch
          %843 = sbr.rel (%p841) target = $region32
        $region31: #{tpu_custom_call.1} parent=27 // pred_region
          %s845 = ssub.s32 512, 512
          %846 = vsyncadd %s837, %s845
          %s847 = smul.addr %s23, 4
          %s848 = sadd.s32 %s22, %s847
          %s849 = smul.addr %s21, 16
          %s850 = sadd.s32 %s848, %s849
          %s851 = smul.addr %s850, 128
          %s852 = scalar_lea.hbm %s2, %s851
          %s853 = sshll.u32 %s840, 4
          %s854 = int_to_ptr.vmem [resolvable:$true] %s853
          %859 = dma.vmem_to_hbm [thread:$0]  %s854, 512, %s852, %s837, 128, 128, 8
        $region32: #{tpu_custom_call.1} parent=27 // pred_fallthru
          _
      $region28: #{tpu_custom_call.1} parent=5 // pred_fallthru
        _
      %p860 = scmp.le.s32.totalorder 2, %s11
      // Predicated region
      $region33: #{tpu_custom_call.1} parent=5 // pred_check
        %p861 = pneg %p860
      $region34: #{tpu_custom_call.1} parent=5 // pred_check_branch
        %863 = sbr.rel (%p861) target = $region36
      $region35: #{tpu_custom_call.1} parent=5 // pred_region
        %s864 = ssub.s32 %s11, 2
        // Predicated region
        $region37: #{tpu_custom_call.1} parent=35 // pred_check
          %p865 = pneg %p117
        $region38: #{tpu_custom_call.1} parent=35 // pred_check_branch
          %867 = sbr.rel (%p865) target = $region40
        $region39: #{tpu_custom_call.1} parent=35 // pred_region
          %s868 = sand.u32 %s102, 1
          %s869 = scalar_lea.sflag [#allocation3], %s868
          %s870 = sand.u32 %s102, 1
          %s871 = smul.addr %s870, 32
          %s872 = scalar_lea.vmem [#allocation2], %s871
          %873 = dma.done %s869, 512
        $region40: #{tpu_custom_call.1} parent=35 // pred_fallthru
          _
      $region36: #{tpu_custom_call.1} parent=5 // pred_fallthru
        _
    $region6: #{tpu_custom_call.1} parent=1 // loop_footer
      %s15 = sadd.s32 1, %s11
    $region7: #{tpu_custom_call.1} parent=1 // loop_footer_branch
      %10 = sbr.rel target = $region3
    $region8: #{tpu_custom_call.1} parent=1 // loop_exit
      _
    %874 = vsyncpa [#allocation3], 1
    %s875 = scalar_lea.sflag [#allocation3], 1
    %876 = vsyncpa %s875, 1

</llo_original>
